<compile_context>
chip_gen: v7x
topology: tpu7x:2x2x1
jax: 0.10.0
libtpu: 0.0.40
codegen_flags: <defaults>
</compile_context>

<pallas_src>
import functools

import jax
import jax.numpy as jnp
import numpy as np
from jax.experimental import pallas as pl
from jax.experimental.pallas import tpu as pltpu


def _round_up(x, m):
    return ((x + m - 1) // m) * m


def _tpu_generation_info():
    """Returns (physical_vmem_bytes, num_tensorcores, has_bf16_alu)."""
    kind = ""
    try:
        kind = getattr(jax.devices()[0], "device_kind", "") or ""
    except Exception:
        pass
    kl = kind.lower()
    is_v7 = "7" in kl
    has_bf16_alu = ("v6" in kl) or is_v7          # bf16 VPU/EUP: v6e and v7x

    vmem_bytes = None
    try:
        info = pltpu.get_tpu_info()
        vmem_bytes = getattr(info, "vmem_capacity_bytes", None)
    except Exception:
        vmem_bytes = None
    if not vmem_bytes:
        vmem_bytes = (64 << 20) if is_v7 else (128 << 20)

    # 2 TensorCores/chip on v7x; v5e/v6e are single-TC.
    # TODO(synk): v4/v5p megacore could also take num_cores=2.
    num_cores = 2 if is_v7 else 1
    return int(vmem_bytes), num_cores, has_bf16_alu


def _choose_tile_b(batch, n_neg, neg_itemsize, compute_itemsize,
                   vmem_limit_bytes, num_splits):
    # Sublane granularity: 8 rows for 32-bit negatives, 16 for 16-bit.
    sublane = 8 * max(1, 4 // max(1, neg_itemsize))
    budget = int(vmem_limit_bytes * 0.6)
    # Per batch-row VMEM: 2x double-buffered native negative block +
    # ~4 live compute-dtype [TB,N] temps + ~2 f32 reduction converts.
    per_row = (2 * n_neg * neg_itemsize
               + 4 * n_neg * compute_itemsize
               + 2 * n_neg * 4
               + 64)
    tb = max(sublane, budget // per_row)
    tb = (tb // sublane) * sublane
    tb = min(tb, 4096)
    rows_per_split = -(-batch // num_splits)
    tb = min(tb, _round_up(rows_per_split, sublane))
    return max(tb, sublane)


def _q2b_loss_kernel(side_ref, neg_ref, out_ref, *, margin, adv_temperature,
                     truncate_loss, neg_adv_sampling, sub_sample, batch,
                     tile_b, tiles_per_split, need_mask, compute_dtype):
    c = pl.program_id(0)          # TensorCore split (parallel)
    t = pl.program_id(1)          # batch-tile index  (arbitrary, accumulator)

    @pl.when(t == 0)
    def _init():
        out_ref[...] = jnp.zeros_like(out_ref)

    cdt = compute_dtype
    neg = neg_ref[...]
    if neg.dtype != cdt:
        neg = neg.astype(cdt)                       # [TB, N] in compute dtype

    x = neg + margin                                # [TB, N]
    # Numerically stable log(sigmoid(-x)) = -max(x,0) - log1p(exp(-|x|)).
    ls = -jnp.maximum(x, 0.0) - jnp.log1p(jnp.exp(-jnp.abs(x)))

    if neg_adv_sampling:
        logits = x if adv_temperature == 1.0 else x * adv_temperature
        m = jnp.max(logits, axis=-1, keepdims=True)
        e = jnp.exp(logits - m)                     # [TB, N] compute dtype
        # Row reductions accumulate in f32; normalisation is an exact f32
        # division on the tiny [TB,1] column.
        z = jnp.sum(e, axis=-1, keepdims=True, dtype=jnp.float32)
        num = jnp.sum(e * ls, axis=-1, keepdims=True, dtype=jnp.float32)
        negative_score = num / z                    # [TB, 1] f32
    else:
        negative_score = (jnp.sum(ls, axis=-1, keepdims=True,
                                  dtype=jnp.float32)
                          * (1.0 / ls.shape[-1]))   # [TB, 1] f32

    # Tiny [TB, <=2] side input: col0 = positive, col1 = normalised ssw.
    pos = side_ref[:, 0:1].astype(jnp.float32)
    if truncate_loss:
        pos = jnp.maximum(pos, -100.0)
    xp = margin + pos
    positive_score = jnp.minimum(xp, 0.0) - jnp.log1p(jnp.exp(-jnp.abs(xp)))

    total = positive_score + negative_score         # [TB, 1] f32
    if sub_sample:
        # ssw already normalised by the *global* sum in the wrapper; padded
        # rows carry ssw == 0, so no mask is needed on this path.
        losses = -(side_ref[:, 1:2] * total)
    else:
        losses = -total

    if need_mask:
        flat = c * tiles_per_split + t
        first_padded = batch // tile_b              # first tile with padding

        @pl.when(flat < first_padded)
        def _unmasked():
            out_ref[...] += jnp.sum(losses)

        @pl.when(flat >= first_padded)
        def _masked():
            rows = flat * tile_b + jax.lax.broadcasted_iota(
                jnp.int32, (tile_b, 1), 0)
            out_ref[...] += jnp.sum(jnp.where(rows < batch, losses, 0.0))
    else:
        out_ref[...] += jnp.sum(losses)


def query2box_loss_pallas(positive, negative, sub_sampling_weight=None, *,
                          margin=12.0, adv_temperature=1.0,
                          truncate_loss=True, neg_adv_sampling=True,
                          sub_sample=True, tile_b=None, compute_dtype=None):
    """positive: [B], negative: [B, N], sub_sampling_weight: [B] (if sub_sample)."""
    B, N = negative.shape
    neg_itemsize = jnp.dtype(negative.dtype).itemsize
    sublane = 8 * max(1, 4 // max(1, neg_itemsize))

    vmem_cap, num_splits, has_bf16_alu = _tpu_generation_info()
    vmem_limit = max(16 << 20, min(int(vmem_cap * 0.75), 96 << 20))

    if compute_dtype is None:
        # bf16 math only when the negatives are already 16-bit AND the chip
        # has bf16 VPU/EUP (v6e/v7x); never on v5e, never widen->narrow f32.
        if has_bf16_alu and negative.dtype == jnp.bfloat16:
            compute_dtype = jnp.bfloat16
        else:
            compute_dtype = jnp.float32
    compute_itemsize = jnp.dtype(compute_dtype).itemsize

    if tile_b is None:
        tb = _choose_tile_b(B, N, neg_itemsize, compute_itemsize,
                            vmem_limit, num_splits)
    else:
        tb = max(sublane, _round_up(int(tile_b), sublane))

    num_tiles_needed = -(-B // tb)
    tiles_per_split = -(-num_tiles_needed // num_splits)
    padded_b = num_splits * tiles_per_split * tb

    # --- pack the tiny per-row side inputs (positive, normalised ssw) ------
    pos_col = positive.reshape(B, 1).astype(jnp.float32)
    if sub_sample:
        assert sub_sampling_weight is not None
        ssw = sub_sampling_weight.astype(jnp.float32)
        ssw = ssw / jnp.sum(ssw)              # global normalisation, not per-tile
        side = jnp.concatenate([pos_col, ssw.reshape(B, 1)], axis=1)
    else:
        side = pos_col
    ncols = side.shape[1]

    neg2d = negative
    if padded_b != B:
        side = jnp.pad(side, ((0, padded_b - B), (0, 0)))
        neg2d = jnp.pad(neg2d, ((0, padded_b - B), (0, 0)))

    need_mask = (padded_b != B) and (not sub_sample)

    kernel = functools.partial(
        _q2b_loss_kernel,
        margin=float(margin),
        adv_temperature=float(adv_temperature),
        truncate_loss=bool(truncate_loss),
        neg_adv_sampling=bool(neg_adv_sampling),
        sub_sample=bool(sub_sample),
        batch=int(B),
        tile_b=int(tb),
        tiles_per_split=int(tiles_per_split),
        need_mask=bool(need_mask),
        compute_dtype=compute_dtype,
    )

    tps = int(tiles_per_split)
    in_specs = [
        pl.BlockSpec((tb, ncols), lambda c, t: (c * tps + t, 0)),
        pl.BlockSpec((tb, N), lambda c, t: (c * tps + t, 0)),
    ]
    # Lane-dense (8,128) per-core accumulator block; element [0,0] of each
    # core's block holds that core's partial sum (scalar broadcast-add).
    out_spec = pl.BlockSpec((8, 128), lambda c, t: (c, 0))

    out = pl.pallas_call(
        kernel,
        out_shape=jax.ShapeDtypeStruct((num_splits * 8, 128), jnp.float32),
        grid=(num_splits, tiles_per_split),
        in_specs=in_specs,
        out_specs=out_spec,
        compiler_params=pltpu.CompilerParams(
            dimension_semantics=("parallel", "arbitrary"),
            vmem_limit_bytes=int(vmem_limit)),
    )(side, neg2d)

    partials = out.reshape(num_splits, 8, 128)[:, 0, 0]
    loss = jnp.sum(partials)
    if not sub_sample:
        loss = loss / jnp.float32(B)       # mean over the *true* batch rows
    return loss


def query2box_loss_ref(positive, negative, sub_sampling_weight=None, *,
                       margin=12.0, adv_temperature=1.0,
                       truncate_loss=True, neg_adv_sampling=True,
                       sub_sample=True):
    """Pure-JAX mirror of the PyTorch forward."""
    pos = positive.astype(jnp.float32)
    neg = negative.astype(jnp.float32)
    if truncate_loss:
        pos = jnp.maximum(pos, jnp.ones_like(pos) * -100.0)
    positive_score = jnp.log(jax.nn.sigmoid(margin + pos))
    negative_score = jnp.log(jax.nn.sigmoid(-(margin + neg)))
    if neg_adv_sampling:
        w = jax.nn.softmax((margin + neg) * adv_temperature, axis=-1)
        negative_score = jnp.sum(w * negative_score, axis=-1)
    else:
        negative_score = jnp.mean(negative_score, axis=-1)
    if sub_sample:
        ssw = sub_sampling_weight.astype(jnp.float32)
        ssw = ssw / jnp.sum(ssw)
        return jnp.sum(-ssw * (positive_score + negative_score))
    return jnp.mean(-(positive_score + negative_score))


if __name__ == "__main__":
    key = jax.random.PRNGKey(0)
    k1, k2, k3, k4, k5 = jax.random.split(key, 5)

    _, _, _has_bf16 = _tpu_generation_info()

    # Config A: adversarial sampling + sub-sampling weights, bf16 negatives
    # (native-dtype DMA; bf16 compute on v6e/v7x), batch not a multiple of
    # the tile -> exercises padding (ssw==0 rows, no mask needed).
    B1, N1 = 10, 128
    pos1 = jax.random.normal(k1, (B1,), jnp.float32) * 4.0
    neg1 = (jax.random.normal(k2, (B1, N1), jnp.float32) * 4.0).astype(jnp.bfloat16)
    ssw1 = jax.random.uniform(k3, (B1,), jnp.float32, minval=0.5, maxval=2.0)
    cfgA = dict(margin=12.0, adv_temperature=1.0, truncate_loss=True,
                neg_adv_sampling=True, sub_sample=True)
    outA = jax.block_until_ready(query2box_loss_pallas(pos1, neg1, ssw1, **cfgA))
    refA = jax.block_until_ready(query2box_loss_ref(pos1, neg1, ssw1, **cfgA))
    tolA = 3e-2 if _has_bf16 else 1e-4   # bf16 [TB,N] math on v6e/v7x
    assert np.allclose(np.asarray(outA), np.asarray(refA),
                       rtol=tolA, atol=tolA), (outA, refA)

    # Config B: no adversarial sampling, plain mean, f32 negatives (so f32
    # compute everywhere), forced small tile -> multi-step grid exercises the
    # cross-step accumulator + last-tile masking.
    B2, N2 = 20, 256
    pos2 = jax.random.normal(k4, (B2,), jnp.float32) * 4.0
    neg2 = jax.random.normal(k5, (B2, N2), jnp.float32) * 4.0
    cfgB = dict(margin=12.0, adv_temperature=1.0, truncate_loss=False,
                neg_adv_sampling=False, sub_sample=False)
    outB = jax.block_until_ready(
        query2box_loss_pallas(pos2, neg2, None, tile_b=8, **cfgB))
    refB = jax.block_until_ready(query2box_loss_ref(pos2, neg2, None, **cfgB))
    assert np.allclose(np.asarray(outB), np.asarray(refB),
                       rtol=1e-4, atol=1e-3), (outB, refB)

    # Config C: non-unit adversarial temperature (exercises the scale branch).
    cfgC = dict(margin=12.0, adv_temperature=0.5, truncate_loss=True,
                neg_adv_sampling=True, sub_sample=True)
    outC = jax.block_until_ready(query2box_loss_pallas(pos1, neg1, ssw1, **cfgC))
    refC = jax.block_until_ready(query2box_loss_ref(pos1, neg1, ssw1, **cfgC))
    assert np.allclose(np.asarray(outC), np.asarray(refC),
                       rtol=tolA, atol=tolA), (outC, refC)

    print("KERNEL_OK")
</pallas_src>

<mosaic_0001>
module attributes {stable_mosaic.version = 11 : i64} {
  func.func @_q2b_loss_kernel(%arg0: i32, %arg1: i32, %arg2: memref<16x2xf32, #tpu.memory_space<vmem>>, %arg3: memref<16x128xbf16, #tpu.memory_space<vmem>>, %arg4: memref<8x128xf32, #tpu.memory_space<vmem>>) attributes {dimension_semantics = [#tpu.dimension_semantics<parallel>, #tpu.dimension_semantics<arbitrary>], iteration_bounds = array<i64: 1, 1>, scalar_prefetch = 0 : i64, scratch_operands = 0 : i64, tpu.core_type = #tpu.core_type<tc>, window_params = [{transform_indices = @transform_0, window_bounds = array<i64: 16, 2>}, {transform_indices = @transform_1, window_bounds = array<i64: 16, 128>}, {transform_indices = @transform_2, window_bounds = array<i64: 8, 128>}]} {
    %c0_i32 = arith.constant 0 : i32
    %0 = arith.cmpi eq, %arg1, %c0_i32 : i32
    %1 = arith.extui %0 : i1 to i32
    %c0_i32_0 = arith.constant 0 : i32
    %2 = arith.cmpi ne, %1, %c0_i32_0 : i32
    scf.if %2 {
      %cst_21 = arith.constant 0.000000e+00 : f32
      %54 = vector.broadcast %cst_21 : f32 to vector<8x128xf32>
      %c0_22 = arith.constant 0 : index
      %c0_23 = arith.constant 0 : index
      %55 = vector.load %arg4[%c0_22, %c0_23] : memref<8x128xf32, #tpu.memory_space<vmem>>, vector<8x128xf32>
      tpu.vector_store %arg4[%c0_22, %c0_23], %54 {strides = array<i32>} : memref<8x128xf32, #tpu.memory_space<vmem>>, vector<8x128xf32>,
    } else {
    }
    %c0 = arith.constant 0 : index
    %c0_1 = arith.constant 0 : index
    %3 = vector.load %arg3[%c0, %c0_1] : memref<16x128xbf16, #tpu.memory_space<vmem>>, vector<16x128xbf16>
    %4 = arith.extf %3 : vector<16x128xbf16> to vector<16x128xf32>
    %cst = arith.constant 1.200000e+01 : f32
    %5 = vector.broadcast %cst : f32 to vector<16x128xf32>
    %6 = arith.addf %4, %5 : vector<16x128xf32>
    %cst_2 = arith.constant 0.000000e+00 : f32
    %7 = vector.broadcast %cst_2 : f32 to vector<16x128xf32>
    %8 = arith.maximumf %6, %7 : vector<16x128xf32>
    %cst_3 = arith.constant 0.000000e+00 : f32
    %9 = vector.broadcast %cst_3 : f32 to vector<16x128xf32>
    %10 = arith.subf %9, %8 : vector<16x128xf32>
    %11 = math.absf %6 : vector<16x128xf32>
    %cst_4 = arith.constant 0.000000e+00 : f32
    %12 = vector.broadcast %cst_4 : f32 to vector<16x128xf32>
    %13 = arith.subf %12, %11 : vector<16x128xf32>
    %14 = math.exp %13 : vector<16x128xf32>
    %15 = math.log1p %14 : vector<16x128xf32>
    %16 = arith.subf %10, %15 : vector<16x128xf32>
    %cst_5 = arith.constant dense<0xFF800000> : vector<16xf32>
    %17 = vector.multi_reduction <maximumf>, %6, %cst_5 [1] : vector<16x128xf32> to vector<16xf32>
    %18 = vector.shape_cast %17 : vector<16xf32> to vector<16x1xf32>
    %19 = vector.broadcast %18 : vector<16x1xf32> to vector<16x128xf32>
    %20 = arith.subf %6, %19 : vector<16x128xf32>
    %21 = math.exp %20 : vector<16x128xf32>
    %cst_6 = arith.constant dense<0.000000e+00> : vector<16xf32>
    %22 = vector.multi_reduction <add>, %21, %cst_6 [1] : vector<16x128xf32> to vector<16xf32>
    %23 = vector.shape_cast %22 : vector<16xf32> to vector<16x1xf32>
    %24 = arith.mulf %21, %16 : vector<16x128xf32>
    %cst_7 = arith.constant dense<0.000000e+00> : vector<16xf32>
    %25 = vector.multi_reduction <add>, %24, %cst_7 [1] : vector<16x128xf32> to vector<16xf32>
    %26 = vector.shape_cast %25 : vector<16xf32> to vector<16x1xf32>
    %27 = arith.divf %26, %23 : vector<16x1xf32>
    %c0_8 = arith.constant 0 : index
    %c0_9 = arith.constant 0 : index
    %28 = vector.load %arg2[%c0_8, %c0_9] : memref<16x2xf32, #tpu.memory_space<vmem>>, vector<16x1xf32>
    %cst_10 = arith.constant -1.000000e+02 : f32
    %29 = vector.broadcast %cst_10 : f32 to vector<16x1xf32>
    %30 = arith.maximumf %28, %29 : vector<16x1xf32>
    %cst_11 = arith.constant 1.200000e+01 : f32
    %31 = vector.broadcast %cst_11 : f32 to vector<16x1xf32>
    %32 = arith.addf %31, %30 : vector<16x1xf32>
    %cst_12 = arith.constant 0.000000e+00 : f32
    %33 = vector.broadcast %cst_12 : f32 to vector<16x1xf32>
    %34 = arith.minimumf %32, %33 : vector<16x1xf32>
    %35 = math.absf %32 : vector<16x1xf32>
    %cst_13 = arith.constant 0.000000e+00 : f32
    %36 = vector.broadcast %cst_13 : f32 to vector<16x1xf32>
    %37 = arith.subf %36, %35 : vector<16x1xf32>
    %38 = math.exp %37 : vector<16x1xf32>
    %39 = math.log1p %38 : vector<16x1xf32>
    %40 = arith.subf %34, %39 : vector<16x1xf32>
    %41 = arith.addf %40, %27 : vector<16x1xf32>
    %c0_14 = arith.constant 0 : index
    %c1 = arith.constant 1 : index
    %42 = vector.load %arg2[%c0_14, %c1] : memref<16x2xf32, #tpu.memory_space<vmem>>, vector<16x1xf32>
    %43 = arith.mulf %42, %41 : vector<16x1xf32>
    %cst_15 = arith.constant 0.000000e+00 : f32
    %44 = vector.broadcast %cst_15 : f32 to vector<16x1xf32>
    %45 = arith.subf %44, %43 : vector<16x1xf32>
    %c0_16 = arith.constant 0 : index
    %c0_17 = arith.constant 0 : index
    %46 = vector.load %arg4[%c0_16, %c0_17] : memref<8x128xf32, #tpu.memory_space<vmem>>, vector<8x128xf32>
    %47 = vector.shape_cast %45 : vector<16x1xf32> to vector<1x16x1xf32>
    %cst_18 = arith.constant dense<0.000000e+00> : vector<1xf32>
    %48 = vector.multi_reduction <add>, %47, %cst_18 [1, 2] : vector<1x16x1xf32> to vector<1xf32>
    %49 = vector.shape_cast %48 : vector<1xf32> to vector<1x1x1xf32>
    %50 = vector.extract %49[0, 0, 0] : f32 from vector<1x1x1xf32>
    %51 = vector.broadcast %50 : f32 to vector<8x128xf32>
    %52 = arith.addf %46, %51 : vector<8x128xf32>
    %c0_19 = arith.constant 0 : index
    %c0_20 = arith.constant 0 : index
    %53 = vector.load %arg4[%c0_19, %c0_20] : memref<8x128xf32, #tpu.memory_space<vmem>>, vector<8x128xf32>
    tpu.vector_store %arg4[%c0_19, %c0_20], %52 {strides = array<i32>} : memref<8x128xf32, #tpu.memory_space<vmem>>, vector<8x128xf32>,
    return
  }
  func.func @transform_0(%arg0: i32, %arg1: i32) -> (i32, i32) {
    %c1_i32 = arith.constant 1 : i32
    %0 = arith.muli %arg0, %c1_i32 : i32
    %1 = arith.addi %0, %arg1 : i32
    %c0_i32 = arith.constant 0 : i32
    %c0_i32_0 = arith.constant 0 : i32
    return %1, %c0_i32 : i32, i32
  }
  func.func @transform_1(%arg0: i32, %arg1: i32) -> (i32, i32) {
    %c1_i32 = arith.constant 1 : i32
    %0 = arith.muli %arg0, %c1_i32 : i32
    %1 = arith.addi %0, %arg1 : i32
    %c0_i32 = arith.constant 0 : i32
    %c0_i32_0 = arith.constant 0 : i32
    return %1, %c0_i32 : i32, i32
  }
  func.func @transform_2(%arg0: i32, %arg1: i32) -> (i32, i32) {
    %c0_i32 = arith.constant 0 : i32
    %c0_i32_0 = arith.constant 0 : i32
    return %arg0, %c0_i32 : i32, i32
  }
}

</mosaic_0001>

<llo_original>
// kernel: tpu_custom_call.1
$region0: #{tpu_custom_call.1}
  #allocation0 [shape = 'u32[]', space=smem, size = 0x4, offset = 0x4, fixed_abs, tag = 'smem constant byte address 0x4 - core index']
  #allocation1 [shape = 'u32[144,128]{1,0:T(1,128)}', space=vmem, size = 0x12000, scoped, tag = 'internal scratch']
  %s0 = inlined_call_operand.hbm [shape: f32[16,2], index: 0, kind: input, shape index: {}]
  %s1 = inlined_call_operand.hbm [shape: bf16[16,128], index: 1, kind: input, shape index: {}]
  %s2 = inlined_call_operand.hbm [shape: f32[8,128], index: 2, kind: output, shape index: {}]
  %s3 = sld [smem:[#allocation0]]
  $region30: #{tpu_custom_call.1} parent=0
    _
  %s5 = ssub.s32 1, %s3
  %s6 = scalar_select 0, %s5, %s3
  $region1: #{tpu_custom_call.1} parent=0
    #allocation2 [shape = 'u8[8192]{0}', space=vmem, size = 0x2000, scoped, tag = 'input window, operand 0, single buffered']
    #allocation3 [shape = 's32[1]{0}', space=sflag, size = 0x4, scoped, tag = 'scoped memory for tpu_custom_call.1']
    #allocation4 [shape = 's32[1]{0}', space=sflag, size = 0x4, scoped, tag = 'scoped memory for tpu_custom_call.1']
    #allocation5 [shape = 'u8[4096]{0}', space=vmem, size = 0x1000, scoped, tag = 'input window, operand 1, single buffered']
    #allocation6 [shape = 's32[1]{0}', space=sflag, size = 0x4, scoped, tag = 'scoped memory for tpu_custom_call.1']
    #allocation7 [shape = 'u8[4096]{0}', space=vmem, size = 0x1000, scoped, tag = 'output window, operand 0, single buffered']
    %7 = vsyncpa [#allocation3], 0
    %8 = vsyncpa [#allocation6], 0
    %9 = vsyncpa [#allocation4], 0
    // Predicated region
    $region2: #{tpu_custom_call.1} parent=1 // pred_check
      _
    $region3: #{tpu_custom_call.1} parent=1 // pred_check_branch
      %11 = sbr.rel (0) target = $region5
    $region4: #{tpu_custom_call.1} parent=1 // pred_region
      %s12 = sadd.s32 0, 0
      %s13 = smul.u32 2, %s12
      %s15 = ssub.s32 256, 256
      %16 = vsyncadd [#allocation3], %s15
      %s17 = smul.addr %s13, 128
      %s18 = scalar_lea.hbm %s0, %s17
      %s19 = sshll.u32 [#allocation2], 4
      %s20 = int_to_ptr.vmem [resolvable:$true] %s19
      %25 = dma.hbm_to_vmem [thread:$0]  %s18, 256, %s20, [#allocation3], 128, 128, 8
    $region5: #{tpu_custom_call.1} parent=1 // pred_fallthru
      _
    // Predicated region
    $region6: #{tpu_custom_call.1} parent=1 // pred_check
      _
    $region7: #{tpu_custom_call.1} parent=1 // pred_check_branch
      %27 = sbr.rel (0) target = $region9
    $region8: #{tpu_custom_call.1} parent=1 // pred_region
      %s28 = sadd.s32 0, 0
      %s29 = smul.u32 2, %s28
      %s31 = ssub.s32 128, 128
      %32 = vsyncadd [#allocation6], %s31
      %s33 = smul.addr %s29, 64
      %s34 = scalar_lea.hbm %s1, %s33
      %s35 = sshll.u32 [#allocation5], 4
      %s36 = int_to_ptr.vmem [resolvable:$true] %s35
      %41 = dma.hbm_to_vmem [thread:$0]  %s34, 128, %s36, [#allocation6], 64, 64, 4
    $region9: #{tpu_custom_call.1} parent=1 // pred_fallthru
      _
    // Predicated region
    $region10: #{tpu_custom_call.1} parent=1 // pred_check
      _
    $region11: #{tpu_custom_call.1} parent=1 // pred_check_branch
      %43 = sbr.rel (0) target = $region13
    $region12: #{tpu_custom_call.1} parent=1 // pred_region
      %44 = dma.done [#allocation3], 256
    $region13: #{tpu_custom_call.1} parent=1 // pred_fallthru
      _
    // Predicated region
    $region14: #{tpu_custom_call.1} parent=1 // pred_check
      _
    $region15: #{tpu_custom_call.1} parent=1 // pred_check_branch
      %46 = sbr.rel (0) target = $region17
    $region16: #{tpu_custom_call.1} parent=1 // pred_region
      %47 = dma.done [#allocation6], 128
    $region17: #{tpu_custom_call.1} parent=1 // pred_fallthru
      _
    %s48 = sadd.s32 0, 0
    %s49 = smul.u32 2, %s48
    %s50 = sadd.s32 0, 0
    %s51 = smul.u32 2, %s50
    %p52 = scmp.eq.s32.totalorder 0, 0
    // Predicated region
    $region18: #{tpu_custom_call.1} parent=1 // pred_check
      %p53 = pneg %p52
    $region19: #{tpu_custom_call.1} parent=1 // pred_check_branch
      %55 = sbr.rel (%p53) target = $region21
    $region20: #{tpu_custom_call.1} parent=1 // pred_region
      %56 = vst [vmem:[#allocation7] sm:$0xff] 0.0
    $region21: #{tpu_custom_call.1} parent=1 // pred_fallthru
      _
    %v57 = vld [vmem:[#allocation5] sm:$0xf]
    %v58 = vld [vmem:[#allocation5 + $0x4] sm:$0xf]
    %v59 = vunpack.c.l.bf16 %v57
    %v60 = vunpack.c.l.bf16 %v58
    %v61 = vadd.f32 %v59, 12.0
    %v62 = vadd.f32 %v60, 12.0
    %v63 = vmax.f32 %v61, 0.0
    %v64 = vmax.f32 %v62, 0.0
    %v65 = vsub.f32 0.0, %v63
    %v66 = vsub.f32 0.0, %v64
    %v67 = vand.u32 2147483647, %v61
    %v68 = vand.u32 2147483647, %v62
    %v69 = vsub.f32 0.0, %v67
    %v70 = vsub.f32 0.0, %v68
    %v71 = vmul.f32 %v69, 1.442695
    %v72 = vpow.pop %v71
    %v73 = vmul.f32 %v70, 1.442695
    %v74 = vpow.pop %v73
    %v75 = vadd.f32 %v72, 1.0
    %v76 = vlog2.pop %v75
    %v77 = vmul.f32 %v76, 0.6931472
    %v78 = vmul.f32 -0.5, %v72
    %v79 = vadd.f32 %v78, 1.0
    %v80 = vmul.f32 %v79, %v72
    %v81 = vand.u32 2147483647, %v72
    %vm82 = vcmp.lt.f32.partialorder %v81, 0.0004427343
    %v83 = vsel %vm82, %v80, %v77
    %v84 = vadd.f32 %v74, 1.0
    %v85 = vlog2.pop %v84
    %v86 = vmul.f32 %v85, 0.6931472
    %v87 = vmul.f32 -0.5, %v74
    %v88 = vadd.f32 %v87, 1.0
    %v89 = vmul.f32 %v88, %v74
    %v90 = vand.u32 2147483647, %v74
    %vm91 = vcmp.lt.f32.partialorder %v90, 0.0004427343
    %v92 = vsel %vm91, %v89, %v86
    %v93 = vsub.f32 %v65, %v83
    %v94 = vsub.f32 %v66, %v92
    %95 = vmax.xlane.f32.xlu0 %v61
    %v96 = vpop.xlane.xlu0 %95
    %97 = vmax.xlane.f32.xlu0 %v62
    %v98 = vpop.xlane.xlu0 %97
    %v99 = vsub.f32 %v61, %v96
    %v100 = vsub.f32 %v62, %v98
    %v101 = vmul.f32 %v99, 1.442695
    %v102 = vpow.pop %v101
    %v103 = vmul.f32 %v100, 1.442695
    %v104 = vpow.pop %v103
    %105 = vadd.xlane.f32.xlu0 %v102
    %v106 = vpop.xlane.xlu0 %105
    %107 = vadd.xlane.f32.xlu0 %v104
    %v108 = vpop.xlane.xlu0 %107
    %v109 = vmul.f32 %v102, %v93
    %v110 = vmul.f32 %v104, %v94
    %111 = vadd.xlane.f32.xlu0 %v109
    %v112 = vpop.xlane.xlu0 %111
    %113 = vadd.xlane.f32.xlu0 %v110
    %v114 = vpop.xlane.xlu0 %113
    %v115 = vrcp.pop %v106
    %v116 = vmul.f32 %v112, %v115
    %v117 = vrcp.pop %v108
    %v118 = vmul.f32 %v114, %v117
    %v119 = vld [vmem:[#allocation2] sm:$0xff]
    %v120 = vld [vmem:[#allocation2 + $0x8] sm:$0xff]
    %v121 = vmax.f32 %v119, -100.0
    %v122 = vmax.f32 %v120, -100.0
    %v123 = vadd.f32 %v121, 12.0
    %v124 = vadd.f32 %v122, 12.0
    %v125 = vmin.f32 %v123, 0.0
    %v126 = vmin.f32 %v124, 0.0
    %v127 = vand.u32 2147483647, %v123
    %v128 = vand.u32 2147483647, %v124
    %v129 = vsub.f32 0.0, %v127
    %v130 = vsub.f32 0.0, %v128
    %v131 = vmul.f32 %v129, 1.442695
    %v132 = vpow.pop %v131
    %v133 = vmul.f32 %v130, 1.442695
    %v134 = vpow.pop %v133
    %v135 = vadd.f32 %v132, 1.0
    %v136 = vlog2.pop %v135
    %v137 = vmul.f32 %v136, 0.6931472
    %v138 = vmul.f32 -0.5, %v132
    %v139 = vadd.f32 %v138, 1.0
    %v140 = vmul.f32 %v139, %v132
    %v141 = vand.u32 2147483647, %v132
    %vm142 = vcmp.lt.f32.partialorder %v141, 0.0004427343
    %v143 = vsel %vm142, %v140, %v137
    %v144 = vadd.f32 %v134, 1.0
    %v145 = vlog2.pop %v144
    %v146 = vmul.f32 %v145, 0.6931472
    %v147 = vmul.f32 -0.5, %v134
    %v148 = vadd.f32 %v147, 1.0
    %v149 = vmul.f32 %v148, %v134
    %v150 = vand.u32 2147483647, %v134
    %vm151 = vcmp.lt.f32.partialorder %v150, 0.0004427343
    %v152 = vsel %vm151, %v149, %v146
    %v153 = vsub.f32 %v125, %v143
    %v154 = vsub.f32 %v126, %v152
    %v155 = vadd.f32 %v153, %v116
    %v156 = vadd.f32 %v154, %v118
    %159 = vrot.lane.b32.xlu0 %v155, 1
    %v160 = vpop.permute.xlu0 %159
    %161 = vrot.lane.b32.xlu0 %v156, 1
    %v162 = vpop.permute.xlu0 %161
    %v165 = vmul.f32 %v119, %v160
    %v166 = vmul.f32 %v120, %v162
    %v167 = vsub.f32 0.0, %v165
    %v168 = vsub.f32 0.0, %v166
    %v169 = vld [vmem:[#allocation7] sm:$0xff]
    %172 = vrot.lane.b32.xlu0 %v167, 127
    %v173 = vpop.permute.xlu0 %172
    %174 = vrot.lane.b32.xlu0 %v168, 127
    %v175 = vpop.permute.xlu0 %174
    %vm178 = vcmask 7168
    %v179 = vsel %vm178, %v173, 0.0
    %v180 = vsel %vm178, %v175, 0.0
    %v181 = vadd.f32 %v179, %v180
    %182 = vadd.xlane.f32.xlu0 %v181
    %v183 = vpop.xlane.xlu0 %182
    %v184 = vrot.slane %v183, 4
    %v185 = vadd.f32 %v183, %v184
    %v186 = vrot.slane %v185, 2
    %v187 = vadd.f32 %v185, %v186
    %v188 = vrot.slane %v187, 1
    %v189 = vadd.f32 %v187, %v188
    %s190 = vtos %v189
    %v191 = vstv %s190
    %v192 = vadd.f32 %v169, %v191
    %193 = vst [vmem:[#allocation7] sm:$0xff] %v192
    // Predicated region
    $region22: #{tpu_custom_call.1} parent=1 // pred_check
      _
    $region23: #{tpu_custom_call.1} parent=1 // pred_check_branch
      %195 = sbr.rel (0) target = $region25
    $region24: #{tpu_custom_call.1} parent=1 // pred_region
      %s197 = ssub.s32 128, 128
      %198 = vsyncadd [#allocation4], %s197
      %s200 = sshll.u32 [#allocation7], 4
      %s201 = int_to_ptr.vmem [resolvable:$true] %s200
      %203 = dma.vmem_to_hbm [thread:$0]  %s201, 128, %s2, [#allocation4]
    $region25: #{tpu_custom_call.1} parent=1 // pred_fallthru
      _
    // Predicated region
    $region26: #{tpu_custom_call.1} parent=1 // pred_check
      _
    $region27: #{tpu_custom_call.1} parent=1 // pred_check_branch
      %205 = sbr.rel (0) target = $region29
    $region28: #{tpu_custom_call.1} parent=1 // pred_region
      %206 = dma.done [#allocation4], 128
    $region29: #{tpu_custom_call.1} parent=1 // pred_fallthru
      _
    %207 = vsyncpa [#allocation3], 1
    %208 = vsyncpa [#allocation6], 1
    %209 = vsyncpa [#allocation4], 1

</llo_original>
